<compile_context>
chip_gen: v6e
topology: v6e:2x2x1
jax: 0.10.0
libtpu: 0.0.40
codegen_flags: <defaults>
</compile_context>

<pallas_src>
import functools

import jax
import jax.numpy as jnp
from jax.experimental import pallas as pl
from jax.experimental.pallas import tpu as pltpu


def _conv1x1_vpu_kernel(x_ref, w_ref, b_ref, o_ref, *, cin):
    """Fused 1x1 conv + affine epilogue as unrolled VPU multiply-add.

    x_ref: (Cin, TILE)   flattened padded-spatial tile (channels on sublanes)
    w_ref: (Cout, Cin)   folded weights  (6 * w)
    b_ref: (Cout, 1)     folded bias     (6 * (b + 3))
    o_ref: (Cout, TILE)  lane-dense output tile
    """
    x = x_ref[...].astype(jnp.float32)        # cast in-kernel (VPU, hidden under HBM)
    w = w_ref[...]                            # (Cout, Cin)
    # out[co, :] = sum_c w[co, c] * x[c, :] -- Cin outer-product FMAs on the VPU.
    acc = w[:, 0:1] * x[0:1, :]               # (Cout,1)*(1,TILE) -> (Cout,TILE)
    for c in range(1, cin):
        acc = acc + w[:, c:c + 1] * x[c:c + 1, :]
    o_ref[...] = acc + b_ref[...]


def _round_up(v, m):
    return ((v + m - 1) // m) * m


def _pick_spatial_tile(lp, n_batch):
    """Lane-dense spatial tile (multiple of 128) with a per-generation-safe cap."""
    # Double-buffered footprint ≈ (Cin + Cout) * 4 B * 2 = 88 B per lane:
    # 131072 lanes ≈ 11.5 MiB -> fits v5e's 16 MiB default scoped VMEM and
    # v6e/v7x's 32 MiB with headroom (v7x physical VMEM is 64 MiB).
    cap = 128 * 1024
    if lp <= 128:
        return lp                            # single full-extent block is legal
    if n_batch >= 2:
        tile = (lp // 128) * 128             # largest 128-multiple <= lp
    else:
        # Batch alone gives no parallelism: split spatial into >= 2 blocks so
        # both TensorCores (megacore / v7x) get work.
        tile = _round_up(-(-lp // 2), 128)
    return max(128, min(cap, tile))


def model_forward(x_nchw, w, b):
    """x_nchw: (N, 3, H, W); w: (Cout, 3, 1, 1); b: (Cout,) -> (N, Cout, H+2, W+2)."""
    N, Cin, H, W = x_nchw.shape
    Cout = w.shape[0]
    Hp, Wp = H + 2, W + 2
    Lp = Hp * Wp

    # One cheap pad pass over the 3-channel input; after this the 1x1 conv is a
    # pure pointwise channel-mix over the flattened padded spatial axis and the
    # kernel emits the full padded output (border lanes see zeros -> b') in a
    # single pass.  No NCHW<->NHWC transposes anywhere.
    x_pad = jnp.pad(x_nchw, ((0, 0), (0, 0), (1, 1), (1, 1)))
    x_flat = x_pad.reshape(N, Cin, Lp)                               # free reshape

    # Constant-fold the (y + 3) * 6 epilogue into the 24 + 8 weight/bias elems.
    w_f = (6.0 * w.reshape(Cout, Cin)).astype(jnp.float32)           # (Cout, Cin)
    b_f = (6.0 * (b.astype(jnp.float32) + 3.0)).reshape(Cout, 1)     # (Cout, 1)

    tile = _pick_spatial_tile(Lp, N)
    n_tiles = pl.cdiv(Lp, tile)          # ragged tail -> masked boundary block

    kernel = functools.partial(_conv1x1_vpu_kernel, cin=Cin)

    out_flat = pl.pallas_call(
        kernel,
        out_shape=jax.ShapeDtypeStruct((N, Cout, Lp), jnp.float32),
        grid=(N, n_tiles),
        in_specs=[
            pl.BlockSpec((None, Cin, tile), lambda n, m: (n, 0, m)),
            pl.BlockSpec((Cout, Cin), lambda n, m: (0, 0)),
            pl.BlockSpec((Cout, 1), lambda n, m: (0, 0)),
        ],
        out_specs=pl.BlockSpec((None, Cout, tile), lambda n, m: (n, 0, m)),
        compiler_params=pltpu.CompilerParams(
            dimension_semantics=("parallel", "parallel")),
    )(x_flat, w_f, b_f)

    return out_flat.reshape(N, Cout, Hp, Wp)


if __name__ == "__main__":
    key = jax.random.PRNGKey(0)
    kx, kw, kb = jax.random.split(key, 3)

    # Small shapes consistent with the module: batch=2, Cin=3, Cout=8, 16x16
    N, Cin, H, W = 2, 3, 16, 16
    Cout = 8

    x = jax.random.normal(kx, (N, Cin, H, W), dtype=jnp.float32)

    # Deterministic parameter init (Conv2d(3, 8, 1) shapes)
    bound = 1.0 / (Cin ** 0.5)
    w = jax.random.uniform(kw, (Cout, Cin, 1, 1), jnp.float32, -bound, bound)
    b = jax.random.uniform(kb, (Cout,), jnp.float32, -bound, bound)

    fwd = jax.jit(model_forward)
    out = jax.block_until_ready(fwd(x, w, b))

    assert out.shape == (N, Cout, H + 2, W + 2), out.shape

    # Plain-JAX reference of the same (valid) forward path.
    x_pad = jnp.pad(x, ((0, 0), (0, 0), (1, 1), (1, 1)))
    ref = jnp.einsum("nchw,oc->nohw", x_pad, w.reshape(Cout, Cin)) \
        + b.reshape(1, Cout, 1, 1)
    ref = (ref + 3.0) * 6.0
    assert jnp.allclose(out, ref, atol=1e-4, rtol=1e-4), \
        float(jnp.max(jnp.abs(out - ref)))

    print("KERNEL_OK")
</pallas_src>

<mosaic_0001>
module attributes {stable_mosaic.version = 11 : i64} {
  func.func @_conv1x1_vpu_kernel(%arg0: i32, %arg1: i32, %arg2: memref<1x3x256xf32, #tpu.memory_space<vmem>>, %arg3: memref<8x3xf32, #tpu.memory_space<vmem>>, %arg4: memref<8x1xf32, #tpu.memory_space<vmem>>, %arg5: memref<1x8x256xf32, #tpu.memory_space<vmem>>) attributes {dimension_semantics = [#tpu.dimension_semantics<parallel>, #tpu.dimension_semantics<parallel>], iteration_bounds = array<i64: 2, 2>, scalar_prefetch = 0 : i64, scratch_operands = 0 : i64, tpu.core_type = #tpu.core_type<tc>, window_params = [{transform_indices = @transform_0, window_bounds = array<i64: 1, 3, 256>}, {pipeline_mode = #tpu.pipeline_mode<synchronous>, transform_indices = @transform_1, window_bounds = array<i64: 8, 3>}, {pipeline_mode = #tpu.pipeline_mode<synchronous>, transform_indices = @transform_2, window_bounds = array<i64: 8, 1>}, {transform_indices = @transform_3, window_bounds = array<i64: 1, 8, 256>}]} {
    %c0 = arith.constant 0 : index
    %c0_0 = arith.constant 0 : index
    %c0_1 = arith.constant 0 : index
    %0 = vector.load %arg2[%c0, %c0_0, %c0_1] : memref<1x3x256xf32, #tpu.memory_space<vmem>>, vector<1x3x256xf32>
    %1 = vector.shape_cast %0 : vector<1x3x256xf32> to vector<3x256xf32>
    %c0_2 = arith.constant 0 : index
    %c0_3 = arith.constant 0 : index
    %2 = vector.load %arg3[%c0_2, %c0_3] : memref<8x3xf32, #tpu.memory_space<vmem>>, vector<8x3xf32>
    %3 = vector.extract_strided_slice %2 {offsets = [0, 0], sizes = [8, 1], strides = [1, 1]} : vector<8x3xf32> to vector<8x1xf32>
    %4 = vector.extract_strided_slice %1 {offsets = [0, 0], sizes = [1, 256], strides = [1, 1]} : vector<3x256xf32> to vector<1x256xf32>
    %5 = vector.broadcast %3 : vector<8x1xf32> to vector<8x256xf32>
    %6 = vector.broadcast %4 : vector<1x256xf32> to vector<8x256xf32>
    %7 = arith.mulf %5, %6 : vector<8x256xf32>
    %8 = vector.extract_strided_slice %2 {offsets = [0, 1], sizes = [8, 1], strides = [1, 1]} : vector<8x3xf32> to vector<8x1xf32>
    %9 = vector.extract_strided_slice %1 {offsets = [1, 0], sizes = [1, 256], strides = [1, 1]} : vector<3x256xf32> to vector<1x256xf32>
    %10 = vector.broadcast %8 : vector<8x1xf32> to vector<8x256xf32>
    %11 = vector.broadcast %9 : vector<1x256xf32> to vector<8x256xf32>
    %12 = arith.mulf %10, %11 : vector<8x256xf32>
    %13 = arith.addf %7, %12 : vector<8x256xf32>
    %14 = vector.extract_strided_slice %2 {offsets = [0, 2], sizes = [8, 1], strides = [1, 1]} : vector<8x3xf32> to vector<8x1xf32>
    %15 = vector.extract_strided_slice %1 {offsets = [2, 0], sizes = [1, 256], strides = [1, 1]} : vector<3x256xf32> to vector<1x256xf32>
    %16 = vector.broadcast %14 : vector<8x1xf32> to vector<8x256xf32>
    %17 = vector.broadcast %15 : vector<1x256xf32> to vector<8x256xf32>
    %18 = arith.mulf %16, %17 : vector<8x256xf32>
    %19 = arith.addf %13, %18 : vector<8x256xf32>
    %c0_4 = arith.constant 0 : index
    %c0_5 = arith.constant 0 : index
    %20 = vector.load %arg4[%c0_4, %c0_5] : memref<8x1xf32, #tpu.memory_space<vmem>>, vector<8x1xf32>
    %21 = vector.broadcast %20 : vector<8x1xf32> to vector<8x256xf32>
    %22 = arith.addf %19, %21 : vector<8x256xf32>
    %c0_6 = arith.constant 0 : index
    %c0_7 = arith.constant 0 : index
    %c0_8 = arith.constant 0 : index
    %23 = vector.load %arg5[%c0_6, %c0_7, %c0_8] : memref<1x8x256xf32, #tpu.memory_space<vmem>>, vector<1x8x256xf32>
    %24 = vector.shape_cast %23 : vector<1x8x256xf32> to vector<8x256xf32>
    %25 = vector.shape_cast %22 : vector<8x256xf32> to vector<1x8x256xf32>
    tpu.vector_store %arg5[%c0_6, %c0_7, %c0_8], %25 {strides = array<i32>} : memref<1x8x256xf32, #tpu.memory_space<vmem>>, vector<1x8x256xf32>,
    return
  }
  func.func @transform_0(%arg0: i32, %arg1: i32) -> (i32, i32, i32) {
    %c0_i32 = arith.constant 0 : i32
    %c0_i32_0 = arith.constant 0 : i32
    return %arg0, %c0_i32, %arg1 : i32, i32, i32
  }
  func.func @transform_1(%arg0: i32, %arg1: i32) -> (i32, i32) {
    %c0_i32 = arith.constant 0 : i32
    %c0_i32_0 = arith.constant 0 : i32
    %c0_i32_1 = arith.constant 0 : i32
    return %c0_i32, %c0_i32_0 : i32, i32
  }
  func.func @transform_2(%arg0: i32, %arg1: i32) -> (i32, i32) {
    %c0_i32 = arith.constant 0 : i32
    %c0_i32_0 = arith.constant 0 : i32
    %c0_i32_1 = arith.constant 0 : i32
    return %c0_i32, %c0_i32_0 : i32, i32
  }
  func.func @transform_3(%arg0: i32, %arg1: i32) -> (i32, i32, i32) {
    %c0_i32 = arith.constant 0 : i32
    %c0_i32_0 = arith.constant 0 : i32
    return %arg0, %c0_i32, %arg1 : i32, i32, i32
  }
}

</mosaic_0001>

<llo_original>
// kernel: model_forward.1
$region0: #{model_forward.1}
  #allocation0 [shape = 'u32[]', space=smem, size = 0x4, offset = 0x4, fixed_abs, tag = 'smem constant byte address 0x4 - core index']
  #allocation1 [shape = 'u32[144,128]{1,0:T(1,128)}', space=vmem, size = 0x12000, scoped, tag = 'internal scratch']
  %s0 = inlined_call_operand.vmem [shape: f32[2,3,324], index: 0, kind: input, shape index: {}]
  %s1 = inlined_call_operand.vmem [shape: f32[8,3], index: 1, kind: input, shape index: {}]
  %s2 = inlined_call_operand.vmem [shape: f32[8,1], index: 2, kind: input, shape index: {}]
  %s3 = inlined_call_operand.vmem [shape: f32[2,8,324], index: 3, kind: output, shape index: {}]
  %s4 = sld [smem:[#allocation0]]
  $region107: #{model_forward.1} parent=0
    _
  %s6 = ssub.s32 1, %s4
  %s7 = scalar_select 0, %s6, %s4
  $region1: #{model_forward.1} parent=0
    #allocation2 [shape = 'u8[16384]{0}', space=vmem, size = 0x4000, scoped, tag = 'output window, operand 0']
    loop: start=0, step=1, limit=6
    $region2: #{model_forward.1} parent=1 // loop_pre_header
      _
    $region3: #{model_forward.1} parent=1 // loop_header
      %s9 = sphi 0, %s13
      %p10 = scmp.ge.s32.totalorder %s9, 6
      %s16 = sphi 0, %s28
      %s17 = sphi 0, %s24
      %s18 = sphi 0, %s16
      %s19 = sphi 0, %s17
      %s20 = sphi 0, %s18
      %s21 = sphi 0, %s19
      %s33 = sphi 0, %s35
      %s36 = sphi 0, %s33
      %s37 = sphi 0, %s36
      %s53 = sphi 0, %s37
      %s57 = sphi 0, %s57
      %s59 = sphi 0, %s57
      %s60 = sphi 0, %s59
      %s74 = sphi 0, %s60
      %s78 = sphi 0, %s78
      %s80 = sphi 0, %s78
      %s81 = sphi 0, %s80
      %s95 = sphi 0, %s81
      %s103 = sphi 0, %s105
      %s106 = sphi 0, %s103
      %s107 = sphi 0, %s106
      %s123 = sphi 0, %s107
    $region4: #{model_forward.1} parent=1 // loop_header_branch
      %12 = sbr.rel (%p10) target = $region8
    $region5: #{model_forward.1} parent=1 // loop_body
      %s14 = ssub.s32 %s9, 1
      %s15 = ssub.s32 %s9, 2
      %s22 = sadd.s32 1, %s17
      %p23 = scmp.ge.s32.totalorder %s22, 2
      %s24 = scalar_select %p23, 0, %s22
      %s25 = sadd.s32 1, %s16
      %s26 = scalar_select %p23, %s25, %s16
      %p27 = scmp.ge.s32.totalorder %s26, 2
      %s28 = scalar_select %p27, 0, %s26
      %s29 = ssub.s32 %s16, %s28
      %s30 = ssub.s32 %s17, %s24
      %s31 = sor.u32 %s29, %s30
      %p32 = scmp.eq.s32.totalorder %s31, 0
      %s34 = sadd.s32 %s33, 1
      %s35 = scalar_select %p32, %s33, %s34
      %p38 = pneg %p32
      %p39 = scmp.eq.s32.totalorder %s9, 3
      %p40 = por %p38, %p39
      %p41 = scmp.ne.s32.totalorder %s33, %s36
      %p42 = scmp.eq.s32.totalorder %s9, 0
      %p43 = por %p41, %p42
      %p44 = scmp.ne.s32.totalorder %s33, %s36
      %p45 = scmp.eq.s32.totalorder %s14, 3
      %p46 = por %p44, %p45
      %p47 = scmp.ne.s32.totalorder %s36, %s37
      %p48 = scmp.eq.s32.totalorder %s14, 0
      %p49 = por %p47, %p48
      %p50 = scmp.ne.s32.totalorder %s36, %s37
      %p51 = scmp.eq.s32.totalorder %s15, 3
      %p52 = por %p50, %p51
      %p54 = scmp.ne.s32.totalorder %s37, %s53
      %p55 = scmp.eq.s32.totalorder %s15, 0
      %p56 = por %p54, %p55
      %s58 = sadd.s32 %s57, 1
      %p61 = scmp.eq.s32.totalorder %s9, 3
      %p62 = scmp.ne.s32.totalorder %s57, %s59
      %p63 = scmp.eq.s32.totalorder %s9, 0
      %p64 = por %p62, %p63
      %p65 = scmp.ne.s32.totalorder %s57, %s59
      %p66 = scmp.eq.s32.totalorder %s14, 3
      %p67 = por %p65, %p66
      %p68 = scmp.ne.s32.totalorder %s59, %s60
      %p69 = scmp.eq.s32.totalorder %s14, 0
      %p70 = por %p68, %p69
      %p71 = scmp.ne.s32.totalorder %s59, %s60
      %p72 = scmp.eq.s32.totalorder %s15, 3
      %p73 = por %p71, %p72
      %p75 = scmp.ne.s32.totalorder %s60, %s74
      %p76 = scmp.eq.s32.totalorder %s15, 0
      %p77 = por %p75, %p76
      %s79 = sadd.s32 %s78, 1
      %p82 = scmp.eq.s32.totalorder %s9, 3
      %p83 = scmp.ne.s32.totalorder %s78, %s80
      %p84 = scmp.eq.s32.totalorder %s9, 0
      %p85 = por %p83, %p84
      %p86 = scmp.ne.s32.totalorder %s78, %s80
      %p87 = scmp.eq.s32.totalorder %s14, 3
      %p88 = por %p86, %p87
      %p89 = scmp.ne.s32.totalorder %s80, %s81
      %p90 = scmp.eq.s32.totalorder %s14, 0
      %p91 = por %p89, %p90
      %p92 = scmp.ne.s32.totalorder %s80, %s81
      %p93 = scmp.eq.s32.totalorder %s15, 3
      %p94 = por %p92, %p93
      %p96 = scmp.ne.s32.totalorder %s81, %s95
      %p97 = scmp.eq.s32.totalorder %s15, 0
      %p98 = por %p96, %p97
      %s99 = ssub.s32 %s16, %s28
      %s100 = ssub.s32 %s17, %s24
      %s101 = sor.u32 %s99, %s100
      %p102 = scmp.eq.s32.totalorder %s101, 0
      %s104 = sadd.s32 %s103, 1
      %s105 = scalar_select %p102, %s103, %s104
      %p108 = pneg %p102
      %p109 = scmp.eq.s32.totalorder %s9, 3
      %p110 = por %p108, %p109
      %p111 = scmp.ne.s32.totalorder %s103, %s106
      %p112 = scmp.eq.s32.totalorder %s9, 0
      %p113 = por %p111, %p112
      %p114 = scmp.ne.s32.totalorder %s103, %s106
      %p115 = scmp.eq.s32.totalorder %s14, 3
      %p116 = por %p114, %p115
      %p117 = scmp.ne.s32.totalorder %s106, %s107
      %p118 = scmp.eq.s32.totalorder %s14, 0
      %p119 = por %p117, %p118
      %p120 = scmp.ne.s32.totalorder %s106, %s107
      %p121 = scmp.eq.s32.totalorder %s15, 3
      %p122 = por %p120, %p121
      %p124 = scmp.ne.s32.totalorder %s107, %s123
      %p125 = scmp.eq.s32.totalorder %s15, 0
      %p126 = por %p124, %p125
      %p127 = scmp.le.s32.totalorder 1, %s9
      %p128 = scmp.lt.s32.totalorder %s9, 5
      %p129 = pnand %p127, %p128
      %p130 = pneg %p129
      // Predicated region
      $region9: #{model_forward.1} parent=5 // pred_check
        _
      $region10: #{model_forward.1} parent=5 // pred_check_branch
        %132 = sbr.rel (%p129) target = $region12
      $region11: #{model_forward.1} parent=5 // pred_region
        %s133 = ssub.s32 %s9, 1
        // Predicated region
        $region13: #{model_forward.1} parent=11 // pred_check
          %p134 = pneg %p70
        $region14: #{model_forward.1} parent=11 // pred_check_branch
          %136 = sbr.rel (%p134) target = $region16
        $region15: #{model_forward.1} parent=11 // pred_region
          _
        $region16: #{model_forward.1} parent=11 // pred_fallthru
          _
        // Predicated region
        $region17: #{model_forward.1} parent=11 // pred_check
          %p137 = pneg %p91
        $region18: #{model_forward.1} parent=11 // pred_check_branch
          %139 = sbr.rel (%p137) target = $region20
        $region19: #{model_forward.1} parent=11 // pred_region
          _
        $region20: #{model_forward.1} parent=11 // pred_fallthru
          _
      $region12: #{model_forward.1} parent=5 // pred_fallthru
        _
      %p140 = scmp.lt.s32.totalorder %s9, 4
      // Predicated region
      $region21: #{model_forward.1} parent=5 // pred_check
        %p141 = pneg %p140
      $region22: #{model_forward.1} parent=5 // pred_check_branch
        %143 = sbr.rel (%p141) target = $region24
      $region23: #{model_forward.1} parent=5 // pred_region
        // Predicated region
        $region25: #{model_forward.1} parent=23 // pred_check
          %p144 = pneg %p43
        $region26: #{model_forward.1} parent=23 // pred_check_branch
          %146 = sbr.rel (%p144) target = $region28
        $region27: #{model_forward.1} parent=23 // pred_region
          %s147 = smul.u32 2, %s17
          %s148 = ssub.s32 3, %s147
          %p149 = scmp.lt.s32.totalorder %s148, 2
          %s150 = scalar_select %p149, %s148, 2
          %s151 = smul.u32 64, %s150
          %p152 = scmp.lt.s32.totalorder %s16, 1
          %s153 = scalar_select %p152, %s16, 1
          %p154 = scmp.lt.s32.totalorder %s147, 2
          %s155 = scalar_select %p154, %s147, 2
          %s156 = smul.addr %s153, 3
          %s157 = sadd.s32 %s155, %s156
          %s158 = smul.addr %s157, 4
          %s159 = scalar_lea.vmem %s0, %s158
          %s160 = smul.u32 2, %s17
          %s161 = ssub.s32 3, %s160
          %p162 = scmp.lt.s32.totalorder %s161, 2
          %s163 = scalar_select %p162, %s161, 2
          %s164 = smul.u32 64, %s163
        $region28: #{model_forward.1} parent=23 // pred_fallthru
          _
      $region24: #{model_forward.1} parent=5 // pred_fallthru
        _
      %p165 = scmp.le.s32.totalorder 1, %s9
      %p166 = scmp.lt.s32.totalorder %s9, 5
      %p167 = pnand %p165, %p166
      %p168 = pneg %p167
      // Predicated region
      $region29: #{model_forward.1} parent=5 // pred_check
        _
      $region30: #{model_forward.1} parent=5 // pred_check_branch
        %170 = sbr.rel (%p167) target = $region32
      $region31: #{model_forward.1} parent=5 // pred_region
        %s171 = ssub.s32 %s9, 1
        %s172 = smul.u32 2, %s19
        %s173 = ssub.s32 3, %s172
        %p174 = scmp.lt.s32.totalorder %s173, 2
        %s175 = scalar_select %p174, %s173, 2
        %s176 = smul.u32 64, %s175
        %p177 = scmp.lt.s32.totalorder %s18, 1
        %s178 = scalar_select %p177, %s18, 1
        %p179 = scmp.lt.s32.totalorder %s172, 2
        %s180 = scalar_select %p179, %s172, 2
        %s181 = smul.addr %s178, 3
        %s182 = sadd.s32 %s180, %s181
        %s183 = smul.addr %s182, 4
        %s184 = scalar_lea.vmem %s0, %s183
        %p185 = pneg %p49
        %p186 = pneg %p46
        %p187 = pneg %p70
        %p188 = pneg %p67
        %p189 = pneg %p91
        %p190 = pneg %p88
        %p191 = pneg %p119
        %p192 = pneg %p116
        %s193 = sand.u32 %s106, 1
        %s194 = sand.u32 %s106, 1
        %s195 = smul.addr %s194, 16
        %s196 = scalar_lea.vmem [#allocation2], %s195
        %s197 = smul.u32 2, %s19
        %s198 = ssub.s32 3, %s197
        %p199 = scmp.lt.s32.totalorder %s198, 2
        %s200 = scalar_select %p199, %s198, 2
        %s201 = smul.u32 64, %s200
        %p202 = scmp.lt.s32.totalorder %s18, 1
        %s203 = scalar_select %p202, %s18, 1
        %p204 = scmp.lt.s32.totalorder %s197, 2
        %s205 = scalar_select %p204, %s197, 2
        %s206 = smul.addr %s203, 3
        %s207 = sadd.s32 %s205, %s206
        %s208 = smul.addr %s207, 4
        %s209 = scalar_lea.vmem %s0, %s208
        %s210 = smul.u32 2, %s19
        %s211 = ssub.s32 3, %s210
        %p212 = scmp.lt.s32.totalorder %s211, 2
        %s213 = scalar_select %p212, %s211, 2
        %s214 = smul.u32 64, %s213
        %s215 = smul.u32 2, %s19
        %s216 = ssub.s32 3, %s215
        %p217 = scmp.lt.s32.totalorder %s216, 2
        %s218 = scalar_select %p217, %s216, 2
        %s219 = smul.u32 128, %s218
        %v220 = vld [vmem:[%s209] sm:$0x77]
        %v221 = vld [vmem:[%s1] sm:$0xff]
        %223 = vset.pattern.permute.xlu0 0
        %224 = vperm.xlu0 %223, %v221
        %v225 = vpop.permute.xlu0 %224
        %v228 = vlaneseq
        %v229 = vshrl.u32 %v228, 7
        %v230 = vsub.s32 0, %v229
        %v231 = vrot.slane %v220, %v230
        %v232 = vlaneseq
        %v233 = vshrl.u32 %v232, 7
        %v234 = vsub.s32 4, %v233
        %v235 = vrot.slane %v220, %v234
        %v238 = vlaneseq
        %v239 = vshrl.u32 %v238, 7
        %v240 = vsub.s32 0, %v239
        %v241 = vrot.slane %v231, %v240
        %v242 = vlaneseq
        %v243 = vshrl.u32 %v242, 7
        %v244 = vsub.s32 0, %v243
        %v245 = vrot.slane %v235, %v244
        %v246 = vmul.f32 %v225, %v241
        %v247 = vmul.f32 %v225, %v245
        %248 = vset.pattern.permute.xlu0 1
        %249 = vperm.xlu0 %248, %v221
        %v250 = vpop.permute.xlu0 %249
        %v252 = vlaneseq
        %v253 = vshrl.u32 %v252, 7
        %v254 = vsub.s32 1, %v253
        %v255 = vrot.slane %v220, %v254
        %v256 = vlaneseq
        %v257 = vshrl.u32 %v256, 7
        %v258 = vsub.s32 5, %v257
        %v259 = vrot.slane %v220, %v258
        %v262 = vlaneseq
        %v263 = vshrl.u32 %v262, 7
        %v264 = vsub.s32 1, %v263
        %v265 = vrot.slane %v255, %v264
        %v266 = vlaneseq
        %v267 = vshrl.u32 %v266, 7
        %v268 = vsub.s32 1, %v267
        %v269 = vrot.slane %v259, %v268
        %v270 = vmul.f32 %v250, %v265
        %v271 = vmul.f32 %v250, %v269
        %v272 = vadd.f32 %v246, %v270
        %v273 = vadd.f32 %v247, %v271
        %274 = vset.pattern.permute.xlu0 2
        %275 = vperm.xlu0 %274, %v221
        %v276 = vpop.permute.xlu0 %275
        %v278 = vlaneseq
        %v279 = vshrl.u32 %v278, 7
        %v280 = vsub.s32 2, %v279
        %v281 = vrot.slane %v220, %v280
        %v282 = vlaneseq
        %v283 = vshrl.u32 %v282, 7
        %v284 = vsub.s32 6, %v283
        %v285 = vrot.slane %v220, %v284
        %v288 = vlaneseq
        %v289 = vshrl.u32 %v288, 7
        %v290 = vsub.s32 2, %v289
        %v291 = vrot.slane %v281, %v290
        %v292 = vlaneseq
        %v293 = vshrl.u32 %v292, 7
        %v294 = vsub.s32 2, %v293
        %v295 = vrot.slane %v285, %v294
        %v296 = vmul.f32 %v276, %v291
        %v297 = vmul.f32 %v276, %v295
        %v298 = vadd.f32 %v272, %v296
        %v299 = vadd.f32 %v273, %v297
        %v300 = vld [vmem:[%s2] sm:$0xff]
        %302 = vset.pattern.permute.xlu0 0
        %303 = vperm.xlu0 %302, %v300
        %v304 = vpop.permute.xlu0 %303
        %v306 = vadd.f32 %v298, %v304
        %v307 = vadd.f32 %v299, %v304
        %308 = vst [vmem:[%s196] sm:$0xff] %v306
        %309 = vst [vmem:[%s196 + $0x8] sm:$0xff] %v307
        %s310 = sand.u32 %s106, 1
        %s311 = sand.u32 %s106, 1
        %s312 = smul.addr %s311, 16
        %s313 = scalar_lea.vmem [#allocation2], %s312
        // Predicated region
        $region33: #{model_forward.1} parent=31 // pred_check
          %p314 = pneg %p116
        $region34: #{model_forward.1} parent=31 // pred_check_branch
          %316 = sbr.rel (%p314) target = $region36
        $region35: #{model_forward.1} parent=31 // pred_region
          %s317 = smul.u32 2, %s19
          %s318 = ssub.s32 3, %s317
          %p319 = scmp.lt.s32.totalorder %s318, 2
          %s320 = scalar_select %p319, %s318, 2
          %s321 = smul.u32 128, %s320
          %p322 = scmp.ne.s32.totalorder 0, %s321
          %s323 = smul.addr %s18, 3
          %s324 = sadd.s32 %s317, %s323
          %s325 = smul.addr %s324, 8
          %s326 = scalar_lea.vmem %s3, %s325
          %s327 = smul.u32 %s320, 8
          // Predicated region
          $region37: #{model_forward.1} parent=35 // pred_check
            %p328 = pneg %p322
          $region38: #{model_forward.1} parent=35 // pred_check_branch
            %330 = sbr.rel (%p328) target = $region40
          $region39: #{model_forward.1} parent=35 // pred_region
            %p331 = scmp.lt.u32.totalorder %s327, 8
            %p332 = pneg %p331
            // Predicated region
            $region41: #{model_forward.1} parent=39 // pred_check
              _
            $region42: #{model_forward.1} parent=39 // pred_check_branch
              %334 = sbr.rel (%p331) target = $region44
            $region43: #{model_forward.1} parent=39 // pred_region
              %s350 = sand.u32 %s327, 7
              %p351 = scmp.eq.s32.totalorder %s350, 0
              // Predicated region
              $region56: #{model_forward.1} parent=43 // pred_check
                %p352 = pneg %p351
              $region57: #{model_forward.1} parent=43 // pred_check_branch
                %354 = sbr.rel (%p352) target = $region59
              $region58: #{model_forward.1} parent=43 // pred_region
                %s355 = sshrl.u32 %s327, 3
                %s356 = sshrl.u32 %s355, 6
                // While loop
                $region60: #{model_forward.1} parent=58 // loop_pre_header
                  _
                $region61: #{model_forward.1} parent=58 // loop_header
                  %s360 = sphi 0, %s362
                  %p361 = scmp.ge.s32.totalorder %s360, %s356
                  %s365 = sphi 0, %s498
                  %s366 = sphi %s313, %s501
                  %s367 = sphi %s326, %s502
                $region62: #{model_forward.1} parent=58 // loop_header_branch
                  %364 = sbr.rel (%p361) target = $region66
                $region63: #{model_forward.1} parent=58 // loop_body
                  %v368 = vld [vmem:[%s366] sm:$0xff]
                  %369 = vst [vmem:[%s367] sm:$0xff] %v368
                  %v370 = vld [vmem:[%s366 + $0x8] sm:$0xff]
                  %371 = vst [vmem:[%s367 + $0x8] sm:$0xff] %v370
                  %v372 = vld [vmem:[%s366 + $0x10] sm:$0xff]
                  %373 = vst [vmem:[%s367 + $0x10] sm:$0xff] %v372
                  %v374 = vld [vmem:[%s366 + $0x18] sm:$0xff]
                  %375 = vst [vmem:[%s367 + $0x18] sm:$0xff] %v374
                  %v376 = vld [vmem:[%s366 + $0x20] sm:$0xff]
                  %377 = vst [vmem:[%s367 + $0x20] sm:$0xff] %v376
                  %v378 = vld [vmem:[%s366 + $0x28] sm:$0xff]
                  %379 = vst [vmem:[%s367 + $0x28] sm:$0xff] %v378
                  %v380 = vld [vmem:[%s366 + $0x30] sm:$0xff]
                  %381 = vst [vmem:[%s367 + $0x30] sm:$0xff] %v380
                  %v382 = vld [vmem:[%s366 + $0x38] sm:$0xff]
                  %383 = vst [vmem:[%s367 + $0x38] sm:$0xff] %v382
                  %v384 = vld [vmem:[%s366 + $0x40] sm:$0xff]
                  %385 = vst [vmem:[%s367 + $0x40] sm:$0xff] %v384
                  %v386 = vld [vmem:[%s366 + $0x48] sm:$0xff]
                  %387 = vst [vmem:[%s367 + $0x48] sm:$0xff] %v386
                  %v388 = vld [vmem:[%s366 + $0x50] sm:$0xff]
                  %389 = vst [vmem:[%s367 + $0x50] sm:$0xff] %v388
                  %v390 = vld [vmem:[%s366 + $0x58] sm:$0xff]
                  %391 = vst [vmem:[%s367 + $0x58] sm:$0xff] %v390
                  %v392 = vld [vmem:[%s366 + $0x60] sm:$0xff]
                  %393 = vst [vmem:[%s367 + $0x60] sm:$0xff] %v392
                  %v394 = vld [vmem:[%s366 + $0x68] sm:$0xff]
                  %395 = vst [vmem:[%s367 + $0x68] sm:$0xff] %v394
                  %v396 = vld [vmem:[%s366 + $0x70] sm:$0xff]
                  %397 = vst [vmem:[%s367 + $0x70] sm:$0xff] %v396
                  %v398 = vld [vmem:[%s366 + $0x78] sm:$0xff]
                  %399 = vst [vmem:[%s367 + $0x78] sm:$0xff] %v398
                  %v400 = vld [vmem:[%s366 + $0x80] sm:$0xff]
                  %401 = vst [vmem:[%s367 + $0x80] sm:$0xff] %v400
                  %v402 = vld [vmem:[%s366 + $0x88] sm:$0xff]
                  %403 = vst [vmem:[%s367 + $0x88] sm:$0xff] %v402
                  %v404 = vld [vmem:[%s366 + $0x90] sm:$0xff]
                  %405 = vst [vmem:[%s367 + $0x90] sm:$0xff] %v404
                  %v406 = vld [vmem:[%s366 + $0x98] sm:$0xff]
                  %407 = vst [vmem:[%s367 + $0x98] sm:$0xff] %v406
                  %v408 = vld [vmem:[%s366 + $0xa0] sm:$0xff]
                  %409 = vst [vmem:[%s367 + $0xa0] sm:$0xff] %v408
                  %v410 = vld [vmem:[%s366 + $0xa8] sm:$0xff]
                  %411 = vst [vmem:[%s367 + $0xa8] sm:$0xff] %v410
                  %v412 = vld [vmem:[%s366 + $0xb0] sm:$0xff]
                  %413 = vst [vmem:[%s367 + $0xb0] sm:$0xff] %v412
                  %v414 = vld [vmem:[%s366 + $0xb8] sm:$0xff]
                  %415 = vst [vmem:[%s367 + $0xb8] sm:$0xff] %v414
                  %v416 = vld [vmem:[%s366 + $0xc0] sm:$0xff]
                  %417 = vst [vmem:[%s367 + $0xc0] sm:$0xff] %v416
                  %v418 = vld [vmem:[%s366 + $0xc8] sm:$0xff]
                  %419 = vst [vmem:[%s367 + $0xc8] sm:$0xff] %v418
                  %v420 = vld [vmem:[%s366 + $0xd0] sm:$0xff]
                  %421 = vst [vmem:[%s367 + $0xd0] sm:$0xff] %v420
                  %v422 = vld [vmem:[%s366 + $0xd8] sm:$0xff]
                  %423 = vst [vmem:[%s367 + $0xd8] sm:$0xff] %v422
                  %v424 = vld [vmem:[%s366 + $0xe0] sm:$0xff]
                  %425 = vst [vmem:[%s367 + $0xe0] sm:$0xff] %v424
                  %v426 = vld [vmem:[%s366 + $0xe8] sm:$0xff]
                  %427 = vst [vmem:[%s367 + $0xe8] sm:$0xff] %v426
                  %v428 = vld [vmem:[%s366 + $0xf0] sm:$0xff]
                  %429 = vst [vmem:[%s367 + $0xf0] sm:$0xff] %v428
                  %v430 = vld [vmem:[%s366 + $0xf8] sm:$0xff]
                  %431 = vst [vmem:[%s367 + $0xf8] sm:$0xff] %v430
                  %v432 = vld [vmem:[%s366 + $0x100] sm:$0xff]
                  %433 = vst [vmem:[%s367 + $0x100] sm:$0xff] %v432
                  %v434 = vld [vmem:[%s366 + $0x108] sm:$0xff]
                  %435 = vst [vmem:[%s367 + $0x108] sm:$0xff] %v434
                  %v436 = vld [vmem:[%s366 + $0x110] sm:$0xff]
                  %437 = vst [vmem:[%s367 + $0x110] sm:$0xff] %v436
                  %v438 = vld [vmem:[%s366 + $0x118] sm:$0xff]
                  %439 = vst [vmem:[%s367 + $0x118] sm:$0xff] %v438
                  %v440 = vld [vmem:[%s366 + $0x120] sm:$0xff]
                  %441 = vst [vmem:[%s367 + $0x120] sm:$0xff] %v440
                  %v442 = vld [vmem:[%s366 + $0x128] sm:$0xff]
                  %443 = vst [vmem:[%s367 + $0x128] sm:$0xff] %v442
                  %v444 = vld [vmem:[%s366 + $0x130] sm:$0xff]
                  %445 = vst [vmem:[%s367 + $0x130] sm:$0xff] %v444
                  %v446 = vld [vmem:[%s366 + $0x138] sm:$0xff]
                  %447 = vst [vmem:[%s367 + $0x138] sm:$0xff] %v446
                  %v448 = vld [vmem:[%s366 + $0x140] sm:$0xff]
                  %449 = vst [vmem:[%s367 + $0x140] sm:$0xff] %v448
                  %v450 = vld [vmem:[%s366 + $0x148] sm:$0xff]
                  %451 = vst [vmem:[%s367 + $0x148] sm:$0xff] %v450
                  %v452 = vld [vmem:[%s366 + $0x150] sm:$0xff]
                  %453 = vst [vmem:[%s367 + $0x150] sm:$0xff] %v452
                  %v454 = vld [vmem:[%s366 + $0x158] sm:$0xff]
                  %455 = vst [vmem:[%s367 + $0x158] sm:$0xff] %v454
                  %v456 = vld [vmem:[%s366 + $0x160] sm:$0xff]
                  %457 = vst [vmem:[%s367 + $0x160] sm:$0xff] %v456
                  %v458 = vld [vmem:[%s366 + $0x168] sm:$0xff]
                  %459 = vst [vmem:[%s367 + $0x168] sm:$0xff] %v458
                  %v460 = vld [vmem:[%s366 + $0x170] sm:$0xff]
                  %461 = vst [vmem:[%s367 + $0x170] sm:$0xff] %v460
                  %v462 = vld [vmem:[%s366 + $0x178] sm:$0xff]
                  %463 = vst [vmem:[%s367 + $0x178] sm:$0xff] %v462
                  %v464 = vld [vmem:[%s366 + $0x180] sm:$0xff]
                  %465 = vst [vmem:[%s367 + $0x180] sm:$0xff] %v464
                  %v466 = vld [vmem:[%s366 + $0x188] sm:$0xff]
                  %467 = vst [vmem:[%s367 + $0x188] sm:$0xff] %v466
                  %v468 = vld [vmem:[%s366 + $0x190] sm:$0xff]
                  %469 = vst [vmem:[%s367 + $0x190] sm:$0xff] %v468
                  %v470 = vld [vmem:[%s366 + $0x198] sm:$0xff]
                  %471 = vst [vmem:[%s367 + $0x198] sm:$0xff] %v470
                  %v472 = vld [vmem:[%s366 + $0x1a0] sm:$0xff]
                  %473 = vst [vmem:[%s367 + $0x1a0] sm:$0xff] %v472
                  %v474 = vld [vmem:[%s366 + $0x1a8] sm:$0xff]
                  %475 = vst [vmem:[%s367 + $0x1a8] sm:$0xff] %v474
                  %v476 = vld [vmem:[%s366 + $0x1b0] sm:$0xff]
                  %477 = vst [vmem:[%s367 + $0x1b0] sm:$0xff] %v476
                  %v478 = vld [vmem:[%s366 + $0x1b8] sm:$0xff]
                  %479 = vst [vmem:[%s367 + $0x1b8] sm:$0xff] %v478
                  %v480 = vld [vmem:[%s366 + $0x1c0] sm:$0xff]
                  %481 = vst [vmem:[%s367 + $0x1c0] sm:$0xff] %v480
                  %v482 = vld [vmem:[%s366 + $0x1c8] sm:$0xff]
                  %483 = vst [vmem:[%s367 + $0x1c8] sm:$0xff] %v482
                  %v484 = vld [vmem:[%s366 + $0x1d0] sm:$0xff]
                  %485 = vst [vmem:[%s367 + $0x1d0] sm:$0xff] %v484
                  %v486 = vld [vmem:[%s366 + $0x1d8] sm:$0xff]
                  %487 = vst [vmem:[%s367 + $0x1d8] sm:$0xff] %v486
                  %v488 = vld [vmem:[%s366 + $0x1e0] sm:$0xff]
                  %489 = vst [vmem:[%s367 + $0x1e0] sm:$0xff] %v488
                  %v490 = vld [vmem:[%s366 + $0x1e8] sm:$0xff]
                  %491 = vst [vmem:[%s367 + $0x1e8] sm:$0xff] %v490
                  %v492 = vld [vmem:[%s366 + $0x1f0] sm:$0xff]
                  %493 = vst [vmem:[%s367 + $0x1f0] sm:$0xff] %v492
                  %v494 = vld [vmem:[%s366 + $0x1f8] sm:$0xff]
                  %495 = vst [vmem:[%s367 + $0x1f8] sm:$0xff] %v494
                  %s496 = sadd.s32 1, %s365
                  %p497 = scmp.ge.s32.totalorder %s496, %s356
                  %s498 = scalar_select %p497, 0, %s496
                  %s499 = smul.u32 %s498, 512
                  %s500 = smul.u32 %s498, 512
                  %s501 = scalar_lea.vmem %s313, %s499 [#allocation2]
                  %s502 = scalar_lea.vmem %s326, %s500
                $region64: #{model_forward.1} parent=58 // loop_footer
                  %s362 = sadd.s32 %s360, 1
                $region65: #{model_forward.1} parent=58 // loop_footer_branch
                  %359 = sbr.rel target = $region61
                $region66: #{model_forward.1} parent=58 // loop_exit
                  _
                %s503 = sshrl.u32 %s355, 6
                %s504 = sand.u32 %s355, 63
                %s505 = smul.u32 %s503, 64
                %s506 = smul.u32 128, %s505
                %s507 = sshra.s32 %s506, 4
                %s508 = scalar_lea.vmem %s313, %s507 [#allocation2]
                %s509 = smul.u32 128, %s505
                %s510 = sshra.s32 %s509, 4
                %s511 = scalar_lea.vmem %s326, %s510
                // While loop
                $region67: #{model_forward.1} parent=58 // loop_pre_header
                  _
                $region68: #{model_forward.1} parent=58 // loop_header
                  %s515 = sphi 0, %s517
                  %p516 = scmp.ge.s32.totalorder %s515, %s504
                  %s520 = sphi 0, %s527
                  %s521 = sphi %s508, %s530
                  %s522 = sphi %s511, %s531
                $region69: #{model_forward.1} parent=58 // loop_header_branch
                  %519 = sbr.rel (%p516) target = $region73
                $region70: #{model_forward.1} parent=58 // loop_body
                  %v523 = vld [vmem:[%s521] sm:$0xff]
                  %524 = vst [vmem:[%s522] sm:$0xff] %v523
                  %s525 = sadd.s32 1, %s520
                  %p526 = scmp.ge.s32.totalorder %s525, %s504
                  %s527 = scalar_select %p526, 0, %s525
                  %s528 = smul.u32 %s527, 8
                  %s529 = smul.u32 %s527, 8
                  %s530 = scalar_lea.vmem %s508, %s528 [#allocation2]
                  %s531 = scalar_lea.vmem %s511, %s529
                $region71: #{model_forward.1} parent=58 // loop_footer
                  %s517 = sadd.s32 %s515, 1
                $region72: #{model_forward.1} parent=58 // loop_footer_branch
                  %514 = sbr.rel target = $region68
                $region73: #{model_forward.1} parent=58 // loop_exit
                  _
              $region59: #{model_forward.1} parent=43 // pred_fallthru
                _
              %p532 = pneg %p351
              // Predicated region
              $region74: #{model_forward.1} parent=43 // pred_check
                _
              $region75: #{model_forward.1} parent=43 // pred_check_branch
                %534 = sbr.rel (%p351) target = $region77
              $region76: #{model_forward.1} parent=43 // pred_region
                %s535 = sand.u32 %s327, 7
                %s536 = ssub.s32 %s327, %s535
                %s537 = scalar_lea.vmem %s313, %s536 [#allocation2]
                %s538 = ssub.s32 %s327, %s535
                %s539 = scalar_lea.vmem %s326, %s538
                %s540 = sshrl.u32 %s327, 3
                %s541 = sshrl.u32 %s540, 6
                // While loop
                $region78: #{model_forward.1} parent=76 // loop_pre_header
                  _
                $region79: #{model_forward.1} parent=76 // loop_header
                  %s545 = sphi 0, %s547
                  %p546 = scmp.ge.s32.totalorder %s545, %s541
                  %s550 = sphi 0, %s683
                  %s551 = sphi %s313, %s686
                  %s552 = sphi %s326, %s687
                $region80: #{model_forward.1} parent=76 // loop_header_branch
                  %549 = sbr.rel (%p546) target = $region84
                $region81: #{model_forward.1} parent=76 // loop_body
                  %v553 = vld [vmem:[%s551] sm:$0xff]
                  %554 = vst [vmem:[%s552] sm:$0xff] %v553
                  %v555 = vld [vmem:[%s551 + $0x8] sm:$0xff]
                  %556 = vst [vmem:[%s552 + $0x8] sm:$0xff] %v555
                  %v557 = vld [vmem:[%s551 + $0x10] sm:$0xff]
                  %558 = vst [vmem:[%s552 + $0x10] sm:$0xff] %v557
                  %v559 = vld [vmem:[%s551 + $0x18] sm:$0xff]
                  %560 = vst [vmem:[%s552 + $0x18] sm:$0xff] %v559
                  %v561 = vld [vmem:[%s551 + $0x20] sm:$0xff]
                  %562 = vst [vmem:[%s552 + $0x20] sm:$0xff] %v561
                  %v563 = vld [vmem:[%s551 + $0x28] sm:$0xff]
                  %564 = vst [vmem:[%s552 + $0x28] sm:$0xff] %v563
                  %v565 = vld [vmem:[%s551 + $0x30] sm:$0xff]
                  %566 = vst [vmem:[%s552 + $0x30] sm:$0xff] %v565
                  %v567 = vld [vmem:[%s551 + $0x38] sm:$0xff]
                  %568 = vst [vmem:[%s552 + $0x38] sm:$0xff] %v567
                  %v569 = vld [vmem:[%s551 + $0x40] sm:$0xff]
                  %570 = vst [vmem:[%s552 + $0x40] sm:$0xff] %v569
                  %v571 = vld [vmem:[%s551 + $0x48] sm:$0xff]
                  %572 = vst [vmem:[%s552 + $0x48] sm:$0xff] %v571
                  %v573 = vld [vmem:[%s551 + $0x50] sm:$0xff]
                  %574 = vst [vmem:[%s552 + $0x50] sm:$0xff] %v573
                  %v575 = vld [vmem:[%s551 + $0x58] sm:$0xff]
                  %576 = vst [vmem:[%s552 + $0x58] sm:$0xff] %v575
                  %v577 = vld [vmem:[%s551 + $0x60] sm:$0xff]
                  %578 = vst [vmem:[%s552 + $0x60] sm:$0xff] %v577
                  %v579 = vld [vmem:[%s551 + $0x68] sm:$0xff]
                  %580 = vst [vmem:[%s552 + $0x68] sm:$0xff] %v579
                  %v581 = vld [vmem:[%s551 + $0x70] sm:$0xff]
                  %582 = vst [vmem:[%s552 + $0x70] sm:$0xff] %v581
                  %v583 = vld [vmem:[%s551 + $0x78] sm:$0xff]
                  %584 = vst [vmem:[%s552 + $0x78] sm:$0xff] %v583
                  %v585 = vld [vmem:[%s551 + $0x80] sm:$0xff]
                  %586 = vst [vmem:[%s552 + $0x80] sm:$0xff] %v585
                  %v587 = vld [vmem:[%s551 + $0x88] sm:$0xff]
                  %588 = vst [vmem:[%s552 + $0x88] sm:$0xff] %v587
                  %v589 = vld [vmem:[%s551 + $0x90] sm:$0xff]
                  %590 = vst [vmem:[%s552 + $0x90] sm:$0xff] %v589
                  %v591 = vld [vmem:[%s551 + $0x98] sm:$0xff]
                  %592 = vst [vmem:[%s552 + $0x98] sm:$0xff] %v591
                  %v593 = vld [vmem:[%s551 + $0xa0] sm:$0xff]
                  %594 = vst [vmem:[%s552 + $0xa0] sm:$0xff] %v593
                  %v595 = vld [vmem:[%s551 + $0xa8] sm:$0xff]
                  %596 = vst [vmem:[%s552 + $0xa8] sm:$0xff] %v595
                  %v597 = vld [vmem:[%s551 + $0xb0] sm:$0xff]
                  %598 = vst [vmem:[%s552 + $0xb0] sm:$0xff] %v597
                  %v599 = vld [vmem:[%s551 + $0xb8] sm:$0xff]
                  %600 = vst [vmem:[%s552 + $0xb8] sm:$0xff] %v599
                  %v601 = vld [vmem:[%s551 + $0xc0] sm:$0xff]
                  %602 = vst [vmem:[%s552 + $0xc0] sm:$0xff] %v601
                  %v603 = vld [vmem:[%s551 + $0xc8] sm:$0xff]
                  %604 = vst [vmem:[%s552 + $0xc8] sm:$0xff] %v603
                  %v605 = vld [vmem:[%s551 + $0xd0] sm:$0xff]
                  %606 = vst [vmem:[%s552 + $0xd0] sm:$0xff] %v605
                  %v607 = vld [vmem:[%s551 + $0xd8] sm:$0xff]
                  %608 = vst [vmem:[%s552 + $0xd8] sm:$0xff] %v607
                  %v609 = vld [vmem:[%s551 + $0xe0] sm:$0xff]
                  %610 = vst [vmem:[%s552 + $0xe0] sm:$0xff] %v609
                  %v611 = vld [vmem:[%s551 + $0xe8] sm:$0xff]
                  %612 = vst [vmem:[%s552 + $0xe8] sm:$0xff] %v611
                  %v613 = vld [vmem:[%s551 + $0xf0] sm:$0xff]
                  %614 = vst [vmem:[%s552 + $0xf0] sm:$0xff] %v613
                  %v615 = vld [vmem:[%s551 + $0xf8] sm:$0xff]
                  %616 = vst [vmem:[%s552 + $0xf8] sm:$0xff] %v615
                  %v617 = vld [vmem:[%s551 + $0x100] sm:$0xff]
                  %618 = vst [vmem:[%s552 + $0x100] sm:$0xff] %v617
                  %v619 = vld [vmem:[%s551 + $0x108] sm:$0xff]
                  %620 = vst [vmem:[%s552 + $0x108] sm:$0xff] %v619
                  %v621 = vld [vmem:[%s551 + $0x110] sm:$0xff]
                  %622 = vst [vmem:[%s552 + $0x110] sm:$0xff] %v621
                  %v623 = vld [vmem:[%s551 + $0x118] sm:$0xff]
                  %624 = vst [vmem:[%s552 + $0x118] sm:$0xff] %v623
                  %v625 = vld [vmem:[%s551 + $0x120] sm:$0xff]
                  %626 = vst [vmem:[%s552 + $0x120] sm:$0xff] %v625
                  %v627 = vld [vmem:[%s551 + $0x128] sm:$0xff]
                  %628 = vst [vmem:[%s552 + $0x128] sm:$0xff] %v627
                  %v629 = vld [vmem:[%s551 + $0x130] sm:$0xff]
                  %630 = vst [vmem:[%s552 + $0x130] sm:$0xff] %v629
                  %v631 = vld [vmem:[%s551 + $0x138] sm:$0xff]
                  %632 = vst [vmem:[%s552 + $0x138] sm:$0xff] %v631
                  %v633 = vld [vmem:[%s551 + $0x140] sm:$0xff]
                  %634 = vst [vmem:[%s552 + $0x140] sm:$0xff] %v633
                  %v635 = vld [vmem:[%s551 + $0x148] sm:$0xff]
                  %636 = vst [vmem:[%s552 + $0x148] sm:$0xff] %v635
                  %v637 = vld [vmem:[%s551 + $0x150] sm:$0xff]
                  %638 = vst [vmem:[%s552 + $0x150] sm:$0xff] %v637
                  %v639 = vld [vmem:[%s551 + $0x158] sm:$0xff]
                  %640 = vst [vmem:[%s552 + $0x158] sm:$0xff] %v639
                  %v641 = vld [vmem:[%s551 + $0x160] sm:$0xff]
                  %642 = vst [vmem:[%s552 + $0x160] sm:$0xff] %v641
                  %v643 = vld [vmem:[%s551 + $0x168] sm:$0xff]
                  %644 = vst [vmem:[%s552 + $0x168] sm:$0xff] %v643
                  %v645 = vld [vmem:[%s551 + $0x170] sm:$0xff]
                  %646 = vst [vmem:[%s552 + $0x170] sm:$0xff] %v645
                  %v647 = vld [vmem:[%s551 + $0x178] sm:$0xff]
                  %648 = vst [vmem:[%s552 + $0x178] sm:$0xff] %v647
                  %v649 = vld [vmem:[%s551 + $0x180] sm:$0xff]
                  %650 = vst [vmem:[%s552 + $0x180] sm:$0xff] %v649
                  %v651 = vld [vmem:[%s551 + $0x188] sm:$0xff]
                  %652 = vst [vmem:[%s552 + $0x188] sm:$0xff] %v651
                  %v653 = vld [vmem:[%s551 + $0x190] sm:$0xff]
                  %654 = vst [vmem:[%s552 + $0x190] sm:$0xff] %v653
                  %v655 = vld [vmem:[%s551 + $0x198] sm:$0xff]
                  %656 = vst [vmem:[%s552 + $0x198] sm:$0xff] %v655
                  %v657 = vld [vmem:[%s551 + $0x1a0] sm:$0xff]
                  %658 = vst [vmem:[%s552 + $0x1a0] sm:$0xff] %v657
                  %v659 = vld [vmem:[%s551 + $0x1a8] sm:$0xff]
                  %660 = vst [vmem:[%s552 + $0x1a8] sm:$0xff] %v659
                  %v661 = vld [vmem:[%s551 + $0x1b0] sm:$0xff]
                  %662 = vst [vmem:[%s552 + $0x1b0] sm:$0xff] %v661
                  %v663 = vld [vmem:[%s551 + $0x1b8] sm:$0xff]
                  %664 = vst [vmem:[%s552 + $0x1b8] sm:$0xff] %v663
                  %v665 = vld [vmem:[%s551 + $0x1c0] sm:$0xff]
                  %666 = vst [vmem:[%s552 + $0x1c0] sm:$0xff] %v665
                  %v667 = vld [vmem:[%s551 + $0x1c8] sm:$0xff]
                  %668 = vst [vmem:[%s552 + $0x1c8] sm:$0xff] %v667
                  %v669 = vld [vmem:[%s551 + $0x1d0] sm:$0xff]
                  %670 = vst [vmem:[%s552 + $0x1d0] sm:$0xff] %v669
                  %v671 = vld [vmem:[%s551 + $0x1d8] sm:$0xff]
                  %672 = vst [vmem:[%s552 + $0x1d8] sm:$0xff] %v671
                  %v673 = vld [vmem:[%s551 + $0x1e0] sm:$0xff]
                  %674 = vst [vmem:[%s552 + $0x1e0] sm:$0xff] %v673
                  %v675 = vld [vmem:[%s551 + $0x1e8] sm:$0xff]
                  %676 = vst [vmem:[%s552 + $0x1e8] sm:$0xff] %v675
                  %v677 = vld [vmem:[%s551 + $0x1f0] sm:$0xff]
                  %678 = vst [vmem:[%s552 + $0x1f0] sm:$0xff] %v677
                  %v679 = vld [vmem:[%s551 + $0x1f8] sm:$0xff]
                  %680 = vst [vmem:[%s552 + $0x1f8] sm:$0xff] %v679
                  %s681 = sadd.s32 1, %s550
                  %p682 = scmp.ge.s32.totalorder %s681, %s541
                  %s683 = scalar_select %p682, 0, %s681
                  %s684 = smul.u32 %s683, 512
                  %s685 = smul.u32 %s683, 512
                  %s686 = scalar_lea.vmem %s313, %s684 [#allocation2]
                  %s687 = scalar_lea.vmem %s326, %s685
                $region82: #{model_forward.1} parent=76 // loop_footer
                  %s547 = sadd.s32 %s545, 1
                $region83: #{model_forward.1} parent=76 // loop_footer_branch
                  %544 = sbr.rel target = $region79
                $region84: #{model_forward.1} parent=76 // loop_exit
                  _
                %s688 = sshrl.u32 %s540, 6
                %s689 = sand.u32 %s540, 63
                %s690 = smul.u32 %s688, 64
                %s691 = smul.u32 128, %s690
                %s692 = sshra.s32 %s691, 4
                %s693 = scalar_lea.vmem %s313, %s692 [#allocation2]
                %s694 = smul.u32 128, %s690
                %s695 = sshra.s32 %s694, 4
                %s696 = scalar_lea.vmem %s326, %s695
                // While loop
                $region85: #{model_forward.1} parent=76 // loop_pre_header
                  _
                $region86: #{model_forward.1} parent=76 // loop_header
                  %s700 = sphi 0, %s702
                  %p701 = scmp.ge.s32.totalorder %s700, %s689
                  %s705 = sphi 0, %s712
                  %s706 = sphi %s693, %s715
                  %s707 = sphi %s696, %s716
                $region87: #{model_forward.1} parent=76 // loop_header_branch
                  %704 = sbr.rel (%p701) target = $region91
                $region88: #{model_forward.1} parent=76 // loop_body
                  %v708 = vld [vmem:[%s706] sm:$0xff]
                  %709 = vst [vmem:[%s707] sm:$0xff] %v708
                  %s710 = sadd.s32 1, %s705
                  %p711 = scmp.ge.s32.totalorder %s710, %s689
                  %s712 = scalar_select %p711, 0, %s710
                  %s713 = smul.u32 %s712, 8
                  %s714 = smul.u32 %s712, 8
                  %s715 = scalar_lea.vmem %s693, %s713 [#allocation2]
                  %s716 = scalar_lea.vmem %s696, %s714
                $region89: #{model_forward.1} parent=76 // loop_footer
                  %s702 = sadd.s32 %s700, 1
                $region90: #{model_forward.1} parent=76 // loop_footer_branch
                  %699 = sbr.rel target = $region86
                $region91: #{model_forward.1} parent=76 // loop_exit
                  _
                %s717 = sshll.u32 1, %s535
                %s718 = ssub.s32 %s717, 1
                loop: start=0, step=1, limit=1
                $region92: #{model_forward.1} parent=76 // loop_pre_header
                  _
                $region93: #{model_forward.1} parent=76 // loop_header
                  %s720 = sphi 0, %s724
                  %p721 = scmp.ge.s32.totalorder %s720, 1
                  %s725 = sphi %s537, %s537
                  %s726 = sphi %s539, %s539
                $region94: #{model_forward.1} parent=76 // loop_header_branch
                  %723 = sbr.rel (%p721) target = $region98
                $region95: #{model_forward.1} parent=76 // loop_body
                  %v727 = vld [vmem:[%s725] sm:%s718]
                  %728 = vst [vmem:[%s726] sm:%s718] %v727
                $region96: #{model_forward.1} parent=76 // loop_footer
                  %s724 = sadd.s32 1, %s720
                $region97: #{model_forward.1} parent=76 // loop_footer_branch
                  %719 = sbr.rel target = $region93
                $region98: #{model_forward.1} parent=76 // loop_exit
                  _
              $region77: #{model_forward.1} parent=43 // pred_fallthru
                _
            $region44: #{model_forward.1} parent=39 // pred_fallthru
              _
            // Predicated region
            $region45: #{model_forward.1} parent=39 // pred_check
              %p335 = pneg %p331
            $region46: #{model_forward.1} parent=39 // pred_check_branch
              %337 = sbr.rel (%p335) target = $region48
            $region47: #{model_forward.1} parent=39 // pred_region
              %s338 = sshll.u32 1, %s327
              %s339 = ssub.s32 %s338, 1
              loop: start=0, step=1, limit=1
              $region49: #{model_forward.1} parent=47 // loop_pre_header
                _
              $region50: #{model_forward.1} parent=47 // loop_header
                %s341 = sphi 0, %s345
                %p342 = scmp.ge.s32.totalorder %s341, 1
                %s346 = sphi %s313, %s313
                %s347 = sphi %s326, %s326
              $region51: #{model_forward.1} parent=47 // loop_header_branch
                %344 = sbr.rel (%p342) target = $region55
              $region52: #{model_forward.1} parent=47 // loop_body
                %v348 = vld [vmem:[%s346] sm:%s339]
                %349 = vst [vmem:[%s347] sm:%s339] %v348
              $region53: #{model_forward.1} parent=47 // loop_footer
                %s345 = sadd.s32 1, %s341
              $region54: #{model_forward.1} parent=47 // loop_footer_branch
                %340 = sbr.rel target = $region50
              $region55: #{model_forward.1} parent=47 // loop_exit
                _
            $region48: #{model_forward.1} parent=39 // pred_fallthru
              _
          $region40: #{model_forward.1} parent=35 // pred_fallthru
            _
          %729 = vnop
        $region36: #{model_forward.1} parent=31 // pred_fallthru
          _
      $region32: #{model_forward.1} parent=5 // pred_fallthru
        _
      %p730 = scmp.le.s32.totalorder 2, %s9
      // Predicated region
      $region99: #{model_forward.1} parent=5 // pred_check
        %p731 = pneg %p730
      $region100: #{model_forward.1} parent=5 // pred_check_branch
        %733 = sbr.rel (%p731) target = $region102
      $region101: #{model_forward.1} parent=5 // pred_region
        %s734 = ssub.s32 %s9, 2
        // Predicated region
        $region103: #{model_forward.1} parent=101 // pred_check
          %p735 = pneg %p122
        $region104: #{model_forward.1} parent=101 // pred_check_branch
          %737 = sbr.rel (%p735) target = $region106
        $region105: #{model_forward.1} parent=101 // pred_region
          %s738 = sand.u32 %s107, 1
          %s739 = sand.u32 %s107, 1
          %s740 = smul.addr %s739, 16
          %s741 = scalar_lea.vmem [#allocation2], %s740
        $region106: #{model_forward.1} parent=101 // pred_fallthru
          _
      $region102: #{model_forward.1} parent=5 // pred_fallthru
        _
    $region6: #{model_forward.1} parent=1 // loop_footer
      %s13 = sadd.s32 1, %s9
    $region7: #{model_forward.1} parent=1 // loop_footer_branch
      %8 = sbr.rel target = $region3
    $region8: #{model_forward.1} parent=1 // loop_exit
      _

</llo_original>
